<compile_context>
chip_gen: v7x
topology: tpu7x:2x2x1
jax: 0.10.0
libtpu: 0.0.40
codegen_flags: <defaults>
</compile_context>

<pallas_src>
import functools

import jax
import jax.numpy as jnp
from jax.experimental import pallas as pl
from jax.experimental.pallas import tpu as pltpu


def _round_up(a: int, b: int) -> int:
    return (a + b - 1) // b * b


def _choose_e_blk(n_edges: int, n_table_rows: int) -> int:
    """Pick the edge tile width (multiple of 128).

    * Budget the [n_table_rows, e_blk] masked-gather temporaries (~3 live
      f32/i32 copies) to stay well inside VMEM / the vreg file.
    * Cap at 4096 lanes.
    * Aim for >= 2 tiles whenever E > 128 so v7x's two TensorCores both get
      work under dimension_semantics=("parallel",).
    """
    budget_per_temp = 2 * 1024 * 1024                         # bytes per [N, e_blk] temp
    by_vmem = (budget_per_temp // (4 * max(n_table_rows, 1))) // 128 * 128
    by_edges = _round_up(max((n_edges + 1) // 2, 1), 128)     # ~half the edges per tile
    return int(max(128, min(4096, by_vmem, by_edges)))


# ----------------------------------------------------------------------------
# Kernel 1: per-node precompute, tiled over node rows.
#   st[:, 0] = relu(x W1^T + b1) . w_xs + y . w_ys + bw   (source contribution)
#   st[:, 1] = relu(x W1^T + b1) . w_xt + y . w_yt        (target contribution)
# Weights (w1t / b1 / wh / wy / b2) are VMEM-resident (index_map -> (0, 0));
# x / y / st stream through in (TN, .) blocks.
# ----------------------------------------------------------------------------
def pg_node_kernel(x_ref, w1t_ref, b1_ref, y_ref, wh_ref, wy_ref, b2_ref, st_ref):
    # Dropout is identity in eval mode.
    h = jnp.dot(x_ref[...], w1t_ref[...], preferred_element_type=jnp.float32) + b1_ref[...]
    h = jnp.maximum(h, 0.0)                                   # [TN, H]
    # TODO(synk): on v6e/v7x cast h / weights to bfloat16 for the MXU dots (keep
    # f32 accumulation); kept f32 here so v5e (no bf16 VALU/EUP) is not regressed.
    st_ref[...] = (jnp.dot(h, wh_ref[...], preferred_element_type=jnp.float32)
                   + jnp.dot(y_ref[...], wy_ref[...], preferred_element_type=jnp.float32)
                   + b2_ref[...])                             # [TN, 2]


# ----------------------------------------------------------------------------
# Kernel 2: per-edge-tile scalar gather + sigmoid.
#   st_ref  : [N, 2]     resident node table (s | t columns)
#   edge_ref: [2, E_BLK] int32, row 0 = src, row 1 = tgt (single packed DMA)
#   out_ref : [1, E_BLK] edge probabilities (lane-dense store)
# ----------------------------------------------------------------------------
def pg_edge_kernel(st_ref, edge_ref, out_ref):
    st = st_ref[...]                                          # [N, 2]
    s_col = st[:, 0:1]                                        # [N, 1]
    t_col = st[:, 1:2]                                        # [N, 1]
    edges = edge_ref[...]                                     # [2, E_BLK]
    src = edges[0:1, :]                                       # [1, E_BLK]
    tgt = edges[1:2, :]                                       # [1, E_BLK]

    n_nodes, e_blk = st.shape[0], edges.shape[1]
    node_id = jax.lax.broadcasted_iota(jnp.int32, (n_nodes, e_blk), 0)

    # Fused masked gather: one contribution array + ONE cross-sublane reduction
    # (instead of two selects, two reductions and an extra add).
    # NOTE: out-of-range node ids contribute 0 -> sigmoid(0)=0.5 instead of
    # failing like PyTorch indexing would; padded edges are sliced off outside.
    contrib = (jnp.where(node_id == src, s_col, 0.0)
               + jnp.where(node_id == tgt, t_col, 0.0))       # [N, E_BLK]
    logit = jnp.sum(contrib, axis=0, keepdims=True)           # [1, E_BLK]

    # sigmoid(x) = 0.5 * (tanh(x / 2) + 1): one EUP push instead of exp + recip.
    out_ref[...] = 0.5 * (jnp.tanh(0.5 * logit) + 1.0)


def pg_model_lsm(x, y_prob, edge_index_train, params, *, e_blk=None, n_blk=512):
    """Forward pass of PGModel with args.G_prior == 'lsm' (eval mode)."""
    w1 = params["x_trans.weight"]      # [H, Din]  (PyTorch layout)
    b1 = params["x_trans.bias"]        # [H]
    w = params["w.weight"]             # [1, 2*(H+C)]
    bw = params["w.bias"]              # [1]

    n_nodes, input_dim = x.shape
    hidden = w1.shape[0]
    num_class = y_prob.shape[1]
    n_edges = edge_index_train.shape[1]

    # Split the "w" Linear weight per the concat order
    # [x_source(H), y_source(C), x_target(H), y_target(C)] and pack source /
    # target columns side by side; edge bias folded into the source column.
    w_xs = w[0, :hidden]
    w_ys = w[0, hidden:hidden + num_class]
    w_xt = w[0, hidden + num_class:2 * hidden + num_class]
    w_yt = w[0, 2 * hidden + num_class:]
    wh = jnp.stack([w_xs, w_xt], axis=1)                         # [H, 2]
    wy = jnp.stack([w_ys, w_yt], axis=1)                         # [C, 2]
    b2 = jnp.concatenate([bw.reshape(1, 1),
                          jnp.zeros((1, 1), bw.dtype)], axis=1)  # [1, 2]

    # ---- Kernel 1: per-node table, tiled over node rows ---------------------
    tn = min(n_blk, _round_up(n_nodes, 8))
    n_pad = _round_up(n_nodes, tn)
    x_p = jnp.pad(x.astype(jnp.float32), ((0, n_pad - n_nodes), (0, 0)))
    y_p = jnp.pad(y_prob.astype(jnp.float32), ((0, n_pad - n_nodes), (0, 0)))

    st_pad = pl.pallas_call(
        pg_node_kernel,
        out_shape=jax.ShapeDtypeStruct((n_pad, 2), jnp.float32),
        grid=(n_pad // tn,),
        in_specs=[
            pl.BlockSpec((tn, input_dim), lambda i: (i, 0)),     # x tile (streams)
            pl.BlockSpec((input_dim, hidden), lambda i: (0, 0)),  # W1^T resident
            pl.BlockSpec((1, hidden), lambda i: (0, 0)),          # b1 resident
            pl.BlockSpec((tn, num_class), lambda i: (i, 0)),      # y tile (streams)
            pl.BlockSpec((hidden, 2), lambda i: (0, 0)),          # wh resident
            pl.BlockSpec((num_class, 2), lambda i: (0, 0)),       # wy resident
            pl.BlockSpec((1, 2), lambda i: (0, 0)),               # b2 resident
        ],
        out_specs=pl.BlockSpec((tn, 2), lambda i: (i, 0)),
        compiler_params=pltpu.CompilerParams(
            dimension_semantics=("parallel",),                    # node tiles independent
            vmem_limit_bytes=32 * 1024 * 1024,                    # explicit, v5e..v7x safe
        ),
    )(x_p, w1.T, b1.reshape(1, -1), y_p, wh, wy, b2)
    st = st_pad[:n_nodes]                                        # drop padded node rows

    # ---- Kernel 2: edge-tiled gather + sigmoid ------------------------------
    if e_blk is None:
        e_blk = _choose_e_blk(n_edges, n_nodes)
    assert e_blk % 128 == 0, "e_blk must be a multiple of 128 (lane width)"
    grid_e = pl.cdiv(n_edges, e_blk)
    e_pad = grid_e * e_blk
    edges = jnp.pad(edge_index_train.astype(jnp.int32),
                    ((0, 0), (0, e_pad - n_edges)))              # [2, E_pad], padded -> node 0

    probs = pl.pallas_call(
        pg_edge_kernel,
        out_shape=jax.ShapeDtypeStruct((1, e_pad), jnp.float32),
        grid=(grid_e,),
        in_specs=[
            pl.BlockSpec((n_nodes, 2), lambda i: (0, 0)),        # node table, VMEM-resident
            pl.BlockSpec((2, e_blk), lambda i: (0, i)),          # packed src/tgt tile (one DMA)
        ],
        out_specs=pl.BlockSpec((1, e_blk), lambda i: (0, i)),    # lane-dense store
        compiler_params=pltpu.CompilerParams(
            dimension_semantics=("parallel",),                   # shard edge tiles across TCs (v7x)
            vmem_limit_bytes=32 * 1024 * 1024,                   # explicit, v5e..v7x safe
        ),
    )(st, edges)

    # Layout plumbing only: lane-dense [1, E_pad] -> [E, 1] like the reference.
    return probs[0, :n_edges].reshape(n_edges, 1)


def pg_model_sbm(P0, P1):
    """args.G_prior == 'sbm' path: sigmoid of two scalars (glue, no kernel needed)."""
    return jax.nn.sigmoid(P0), jax.nn.sigmoid(P1)


def _reference_lsm(x, y_prob, edge_index, params):
    """Pure-JAX reference of the PyTorch forward (eval mode) for verification."""
    w1, b1 = params["x_trans.weight"], params["x_trans.bias"]
    w, bw = params["w.weight"], params["w.bias"]
    h = jax.nn.relu(x @ w1.T + b1)
    src, tgt = edge_index[0], edge_index[1]
    xy = jnp.concatenate([h[src], y_prob[src], h[tgt], y_prob[tgt]], axis=1)
    return jax.nn.sigmoid(xy @ w.T + bw)


if __name__ == "__main__":
    # Small synthetic shapes consistent with the module.
    N, INPUT_DIM, HIDDEN_DIM, NUM_CLASS, E = 16, 8, 32, 4, 8

    key = jax.random.PRNGKey(0)
    k_x, k_y, k_e, k_w1, k_b1, k_w, k_bw = jax.random.split(key, 7)

    x = jax.random.normal(k_x, (N, INPUT_DIM), dtype=jnp.float32)
    y_logits = jax.random.normal(k_y, (N, NUM_CLASS), dtype=jnp.float32)
    y_prob = jax.nn.softmax(y_logits, axis=-1)
    edge_index = jax.random.randint(k_e, (2, E), 0, N, dtype=jnp.int32)

    params = {
        "x_trans.weight": 0.1 * jax.random.normal(k_w1, (HIDDEN_DIM, INPUT_DIM), jnp.float32),
        "x_trans.bias": 0.1 * jax.random.normal(k_b1, (HIDDEN_DIM,), jnp.float32),
        "w.weight": 0.1 * jax.random.normal(k_w, (1, 2 * (HIDDEN_DIM + NUM_CLASS)), jnp.float32),
        "w.bias": 0.1 * jax.random.normal(k_bw, (1,), jnp.float32),
    }

    # jit the wrapper so the weight splits / stacks / padding are folded once
    # at trace time instead of being re-issued per call.
    forward = jax.jit(functools.partial(pg_model_lsm, params=params))

    edge_prob = forward(x, y_prob, edge_index)
    edge_prob = jax.block_until_ready(edge_prob)

    ref = _reference_lsm(x, y_prob, edge_index, params)
    assert edge_prob.shape == (E, 1)
    assert jnp.allclose(edge_prob, ref, atol=1e-5, rtol=1e-5), "mismatch vs reference"

    # sbm path (trivial) for completeness.
    p0, p1 = pg_model_sbm(jnp.float32(0.3), jnp.float32(-0.7))
    jax.block_until_ready((p0, p1))

    print("KERNEL_OK")
</pallas_src>

<mosaic_0001>
module attributes {stable_mosaic.version = 11 : i64} {
  func.func @pg_node_kernel(%arg0: i32, %arg1: memref<16x8xf32, #tpu.memory_space<vmem>>, %arg2: memref<8x32xf32, #tpu.memory_space<vmem>>, %arg3: memref<1x32xf32, #tpu.memory_space<vmem>>, %arg4: memref<16x4xf32, #tpu.memory_space<vmem>>, %arg5: memref<32x2xf32, #tpu.memory_space<vmem>>, %arg6: memref<4x2xf32, #tpu.memory_space<vmem>>, %arg7: memref<1x2xf32, #tpu.memory_space<vmem>>, %arg8: memref<16x2xf32, #tpu.memory_space<vmem>>) attributes {dimension_semantics = [#tpu.dimension_semantics<parallel>], iteration_bounds = array<i64: 1>, scalar_prefetch = 0 : i64, scratch_operands = 0 : i64, tpu.core_type = #tpu.core_type<tc>, window_params = [{transform_indices = @transform_0, window_bounds = array<i64: 16, 8>}, {pipeline_mode = #tpu.pipeline_mode<synchronous>, transform_indices = @transform_1, window_bounds = array<i64: 8, 32>}, {pipeline_mode = #tpu.pipeline_mode<synchronous>, transform_indices = @transform_2, window_bounds = array<i64: 1, 32>}, {transform_indices = @transform_3, window_bounds = array<i64: 16, 4>}, {pipeline_mode = #tpu.pipeline_mode<synchronous>, transform_indices = @transform_4, window_bounds = array<i64: 32, 2>}, {pipeline_mode = #tpu.pipeline_mode<synchronous>, transform_indices = @transform_5, window_bounds = array<i64: 4, 2>}, {pipeline_mode = #tpu.pipeline_mode<synchronous>, transform_indices = @transform_6, window_bounds = array<i64: 1, 2>}, {transform_indices = @transform_7, window_bounds = array<i64: 16, 2>}]} {
    %c0 = arith.constant 0 : index
    %c0_0 = arith.constant 0 : index
    %0 = vector.load %arg1[%c0, %c0_0] : memref<16x8xf32, #tpu.memory_space<vmem>>, vector<16x8xf32>
    %c0_1 = arith.constant 0 : index
    %c0_2 = arith.constant 0 : index
    %1 = vector.load %arg2[%c0_1, %c0_2] : memref<8x32xf32, #tpu.memory_space<vmem>>, vector<8x32xf32>
    %cst = arith.constant dense<0.000000e+00> : vector<16x32xf32>
    %2 = tpu.matmul %0, %1, %cst {dimension_numbers = #tpu.dot_dimension_numbers<[1], [0], [0], [1], [0, 0, 1, 1], [], []>} : vector<16x8xf32>, vector<8x32xf32>, vector<16x32xf32> -> vector<16x32xf32>
    %c0_3 = arith.constant 0 : index
    %c0_4 = arith.constant 0 : index
    %3 = vector.load %arg3[%c0_3, %c0_4] : memref<1x32xf32, #tpu.memory_space<vmem>>, vector<1x32xf32>
    %4 = vector.broadcast %3 : vector<1x32xf32> to vector<16x32xf32>
    %5 = arith.addf %2, %4 : vector<16x32xf32>
    %cst_5 = arith.constant 0.000000e+00 : f32
    %6 = vector.broadcast %cst_5 : f32 to vector<16x32xf32>
    %7 = arith.maximumf %5, %6 : vector<16x32xf32>
    %c0_6 = arith.constant 0 : index
    %c0_7 = arith.constant 0 : index
    %8 = vector.load %arg5[%c0_6, %c0_7] : memref<32x2xf32, #tpu.memory_space<vmem>>, vector<32x2xf32>
    %cst_8 = arith.constant dense<0.000000e+00> : vector<16x2xf32>
    %9 = tpu.matmul %7, %8, %cst_8 {dimension_numbers = #tpu.dot_dimension_numbers<[1], [0], [0], [1], [0, 0, 1, 1], [], []>} : vector<16x32xf32>, vector<32x2xf32>, vector<16x2xf32> -> vector<16x2xf32>
    %c0_9 = arith.constant 0 : index
    %c0_10 = arith.constant 0 : index
    %10 = vector.load %arg4[%c0_9, %c0_10] : memref<16x4xf32, #tpu.memory_space<vmem>>, vector<16x4xf32>
    %c0_11 = arith.constant 0 : index
    %c0_12 = arith.constant 0 : index
    %11 = vector.load %arg6[%c0_11, %c0_12] : memref<4x2xf32, #tpu.memory_space<vmem>>, vector<4x2xf32>
    %cst_13 = arith.constant dense<0.000000e+00> : vector<16x2xf32>
    %12 = tpu.matmul %10, %11, %cst_13 {dimension_numbers = #tpu.dot_dimension_numbers<[1], [0], [0], [1], [0, 0, 1, 1], [], []>} : vector<16x4xf32>, vector<4x2xf32>, vector<16x2xf32> -> vector<16x2xf32>
    %13 = arith.addf %9, %12 : vector<16x2xf32>
    %c0_14 = arith.constant 0 : index
    %c0_15 = arith.constant 0 : index
    %14 = vector.load %arg7[%c0_14, %c0_15] : memref<1x2xf32, #tpu.memory_space<vmem>>, vector<1x2xf32>
    %15 = vector.broadcast %14 : vector<1x2xf32> to vector<16x2xf32>
    %16 = arith.addf %13, %15 : vector<16x2xf32>
    %c0_16 = arith.constant 0 : index
    %c0_17 = arith.constant 0 : index
    %17 = vector.load %arg8[%c0_16, %c0_17] : memref<16x2xf32, #tpu.memory_space<vmem>>, vector<16x2xf32>
    tpu.vector_store %arg8[%c0_16, %c0_17], %16 {strides = array<i32>} : memref<16x2xf32, #tpu.memory_space<vmem>>, vector<16x2xf32>,
    return
  }
  func.func @transform_0(%arg0: i32) -> (i32, i32) {
    %c0_i32 = arith.constant 0 : i32
    %c0_i32_0 = arith.constant 0 : i32
    return %arg0, %c0_i32 : i32, i32
  }
  func.func @transform_1(%arg0: i32) -> (i32, i32) {
    %c0_i32 = arith.constant 0 : i32
    %c0_i32_0 = arith.constant 0 : i32
    %c0_i32_1 = arith.constant 0 : i32
    return %c0_i32, %c0_i32_0 : i32, i32
  }
  func.func @transform_2(%arg0: i32) -> (i32, i32) {
    %c0_i32 = arith.constant 0 : i32
    %c0_i32_0 = arith.constant 0 : i32
    %c0_i32_1 = arith.constant 0 : i32
    return %c0_i32, %c0_i32_0 : i32, i32
  }
  func.func @transform_3(%arg0: i32) -> (i32, i32) {
    %c0_i32 = arith.constant 0 : i32
    %c0_i32_0 = arith.constant 0 : i32
    return %arg0, %c0_i32 : i32, i32
  }
  func.func @transform_4(%arg0: i32) -> (i32, i32) {
    %c0_i32 = arith.constant 0 : i32
    %c0_i32_0 = arith.constant 0 : i32
    %c0_i32_1 = arith.constant 0 : i32
    return %c0_i32, %c0_i32_0 : i32, i32
  }
  func.func @transform_5(%arg0: i32) -> (i32, i32) {
    %c0_i32 = arith.constant 0 : i32
    %c0_i32_0 = arith.constant 0 : i32
    %c0_i32_1 = arith.constant 0 : i32
    return %c0_i32, %c0_i32_0 : i32, i32
  }
  func.func @transform_6(%arg0: i32) -> (i32, i32) {
    %c0_i32 = arith.constant 0 : i32
    %c0_i32_0 = arith.constant 0 : i32
    %c0_i32_1 = arith.constant 0 : i32
    return %c0_i32, %c0_i32_0 : i32, i32
  }
  func.func @transform_7(%arg0: i32) -> (i32, i32) {
    %c0_i32 = arith.constant 0 : i32
    %c0_i32_0 = arith.constant 0 : i32
    return %arg0, %c0_i32 : i32, i32
  }
}

module attributes {stable_mosaic.version = 11 : i64} {
  func.func @pg_edge_kernel(%arg0: i32, %arg1: memref<16x2xf32, #tpu.memory_space<vmem>>, %arg2: memref<2x128xi32, #tpu.memory_space<vmem>>, %arg3: memref<1x128xf32, #tpu.memory_space<vmem>>) attributes {dimension_semantics = [#tpu.dimension_semantics<parallel>], iteration_bounds = array<i64: 1>, scalar_prefetch = 0 : i64, scratch_operands = 0 : i64, tpu.core_type = #tpu.core_type<tc>, window_params = [{pipeline_mode = #tpu.pipeline_mode<synchronous>, transform_indices = @transform_0, window_bounds = array<i64: 16, 2>}, {transform_indices = @transform_1, window_bounds = array<i64: 2, 128>}, {transform_indices = @transform_2, window_bounds = array<i64: 1, 128>}]} {
    %c0 = arith.constant 0 : index
    %c0_0 = arith.constant 0 : index
    %0 = vector.load %arg1[%c0, %c0_0] : memref<16x2xf32, #tpu.memory_space<vmem>>, vector<16x2xf32>
    %1 = vector.extract_strided_slice %0 {offsets = [0, 0], sizes = [16, 1], strides = [1, 1]} : vector<16x2xf32> to vector<16x1xf32>
    %2 = vector.extract_strided_slice %0 {offsets = [0, 1], sizes = [16, 1], strides = [1, 1]} : vector<16x2xf32> to vector<16x1xf32>
    %c0_1 = arith.constant 0 : index
    %c0_2 = arith.constant 0 : index
    %3 = vector.load %arg2[%c0_1, %c0_2] : memref<2x128xi32, #tpu.memory_space<vmem>>, vector<2x128xi32>
    %4 = vector.extract_strided_slice %3 {offsets = [0, 0], sizes = [1, 128], strides = [1, 1]} : vector<2x128xi32> to vector<1x128xi32>
    %5 = vector.extract_strided_slice %3 {offsets = [1, 0], sizes = [1, 128], strides = [1, 1]} : vector<2x128xi32> to vector<1x128xi32>
    %6 = tpu.iota {dimensions = array<i32: 0>} : vector<16x128xi32>
    %7 = vector.broadcast %4 : vector<1x128xi32> to vector<16x128xi32>
    %8 = arith.cmpi eq, %6, %7 : vector<16x128xi32>
    %cst = arith.constant 0.000000e+00 : f32
    %9 = vector.shape_cast %1 : vector<16x1xf32> to vector<16x1xf32>
    %10 = vector.broadcast %9 : vector<16x1xf32> to vector<16x128xf32>
    %11 = vector.broadcast %cst : f32 to vector<16x128xf32>
    %12 = arith.select %8, %10, %11 : vector<16x128xi1>, vector<16x128xf32>
    %13 = vector.broadcast %5 : vector<1x128xi32> to vector<16x128xi32>
    %14 = arith.cmpi eq, %6, %13 : vector<16x128xi32>
    %cst_3 = arith.constant 0.000000e+00 : f32
    %15 = vector.shape_cast %2 : vector<16x1xf32> to vector<16x1xf32>
    %16 = vector.broadcast %15 : vector<16x1xf32> to vector<16x128xf32>
    %17 = vector.broadcast %cst_3 : f32 to vector<16x128xf32>
    %18 = arith.select %14, %16, %17 : vector<16x128xi1>, vector<16x128xf32>
    %19 = arith.addf %12, %18 : vector<16x128xf32>
    %cst_4 = arith.constant dense<0.000000e+00> : vector<128xf32>
    %20 = vector.multi_reduction <add>, %19, %cst_4 [0] : vector<16x128xf32> to vector<128xf32>
    %21 = vector.shape_cast %20 : vector<128xf32> to vector<1x128xf32>
    %cst_5 = arith.constant 5.000000e-01 : f32
    %22 = vector.broadcast %cst_5 : f32 to vector<1x128xf32>
    %23 = arith.mulf %22, %21 : vector<1x128xf32>
    %24 = math.tanh %23 : vector<1x128xf32>
    %cst_6 = arith.constant 1.000000e+00 : f32
    %25 = vector.broadcast %cst_6 : f32 to vector<1x128xf32>
    %26 = arith.addf %24, %25 : vector<1x128xf32>
    %cst_7 = arith.constant 5.000000e-01 : f32
    %27 = vector.broadcast %cst_7 : f32 to vector<1x128xf32>
    %28 = arith.mulf %27, %26 : vector<1x128xf32>
    %c0_8 = arith.constant 0 : index
    %c0_9 = arith.constant 0 : index
    %29 = vector.load %arg3[%c0_8, %c0_9] : memref<1x128xf32, #tpu.memory_space<vmem>>, vector<1x128xf32>
    tpu.vector_store %arg3[%c0_8, %c0_9], %28 {strides = array<i32>} : memref<1x128xf32, #tpu.memory_space<vmem>>, vector<1x128xf32>,
    return
  }
  func.func @transform_0(%arg0: i32) -> (i32, i32) {
    %c0_i32 = arith.constant 0 : i32
    %c0_i32_0 = arith.constant 0 : i32
    %c0_i32_1 = arith.constant 0 : i32
    return %c0_i32, %c0_i32_0 : i32, i32
  }
  func.func @transform_1(%arg0: i32) -> (i32, i32) {
    %c0_i32 = arith.constant 0 : i32
    %c0_i32_0 = arith.constant 0 : i32
    return %c0_i32, %arg0 : i32, i32
  }
  func.func @transform_2(%arg0: i32) -> (i32, i32) {
    %c0_i32 = arith.constant 0 : i32
    %c0_i32_0 = arith.constant 0 : i32
    return %c0_i32, %arg0 : i32, i32
  }
}

</mosaic_0001>

<llo_original>
// kernel: pg_model_lsm.3
$region0: #{pg_model_lsm.3}
  #allocation0 [shape = 'u32[]', space=smem, size = 0x4, offset = 0x4, fixed_abs, tag = 'smem constant byte address 0x4 - core index']
  #allocation1 [shape = 'u32[144,128]{1,0:T(1,128)}', space=vmem, size = 0x12000, scoped, tag = 'internal scratch']
  %s0 = inlined_call_operand.vmem [shape: f32[16,2], index: 0, kind: input, shape index: {}]
  %s1 = inlined_call_operand.vmem [shape: s32[2,128], index: 1, kind: input, shape index: {}]
  %s2 = inlined_call_operand.vmem [shape: f32[1,128], index: 2, kind: output, shape index: {}]
  %s3 = sld [smem:[#allocation0]]
  $region18: #{pg_model_lsm.3} parent=0
    _
  %s5 = ssub.s32 1, %s3
  %s6 = scalar_select 0, %s5, %s3
  // Predicated region
  $region2: #{pg_model_lsm.3} parent=0 // pred_check
    _
  $region3: #{pg_model_lsm.3} parent=0 // pred_check_branch
    %8 = sbr.rel (0) target = $region5
  $region4: #{pg_model_lsm.3} parent=0 // pred_region
    _
  $region5: #{pg_model_lsm.3} parent=0 // pred_fallthru
    _
  // Predicated region
  $region6: #{pg_model_lsm.3} parent=0 // pred_check
    _
  $region7: #{pg_model_lsm.3} parent=0 // pred_check_branch
    %10 = sbr.rel (0) target = $region9
  $region8: #{pg_model_lsm.3} parent=0 // pred_region
    _
  $region9: #{pg_model_lsm.3} parent=0 // pred_fallthru
    _
  %v11 = vld [vmem:[%s0] sm:$0xff]
  %v12 = vld [vmem:[%s0 + $0x8] sm:$0xff]
  %v13 = vld [vmem:[%s1] sm:$0x3]
  %v14 = vlaneseq
  %v15 = vshrl.u32 %v14, 7
  %v16 = vadd.s32 %v15, 8
  %v17 = vlaneseq
  %v18 = vshrl.u32 %v17, 7
  %v19 = vsub.s32 0, %v18
  %v20 = vrot.slane %v13, %v19
  %vm21 = vcmp.eq.s32.totalorder %v15, %v20
  %vm22 = vcmp.eq.s32.totalorder %v16, %v20
  %24 = vset.pattern.permute.xlu0 0
  %25 = vperm.xlu0 %24, %v11
  %v26 = vpop.permute.xlu0 %25
  %29 = vset.pattern.permute.xlu0 0
  %30 = vperm.xlu0 %29, %v12
  %v31 = vpop.permute.xlu0 %30
  %v33 = vsel %vm21, %v26, 0.0
  %v34 = vsel %vm22, %v31, 0.0
  %v35 = vlaneseq
  %v36 = vshrl.u32 %v35, 7
  %v37 = vsub.s32 1, %v36
  %v38 = vrot.slane %v13, %v37
  %vm39 = vcmp.eq.s32.totalorder %v15, %v38
  %vm40 = vcmp.eq.s32.totalorder %v16, %v38
  %41 = vset.pattern.permute.xlu0 1
  %42 = vperm.xlu0 %41, %v11
  %v43 = vpop.permute.xlu0 %42
  %45 = vset.pattern.permute.xlu0 1
  %46 = vperm.xlu0 %45, %v12
  %v47 = vpop.permute.xlu0 %46
  %v49 = vsel %vm39, %v43, 0.0
  %v50 = vsel %vm40, %v47, 0.0
  %v51 = vadd.f32 %v33, %v49
  %v52 = vadd.f32 %v34, %v50
  %v53 = vadd.f32 %v51, %v52
  %v54 = vrot.slane %v53, 4
  %v55 = vadd.f32 %v53, %v54
  %v56 = vrot.slane %v55, 2
  %v57 = vadd.f32 %v55, %v56
  %v58 = vrot.slane %v57, 1
  %v59 = vadd.f32 %v57, %v58
  %v60 = vmul.f32 %v59, 0.5
  %v61 = vtanh.pop %v60
  %v62 = vadd.f32 %v61, 1.0
  %v63 = vmul.f32 %v62, 0.5
  %64 = vst [vmem:[%s2] sm:$0x1] %v63
  // Predicated region
  $region10: #{pg_model_lsm.3} parent=0 // pred_check
    _
  $region11: #{pg_model_lsm.3} parent=0 // pred_check_branch
    %66 = sbr.rel (0) target = $region13
  $region12: #{pg_model_lsm.3} parent=0 // pred_region
    _
  $region13: #{pg_model_lsm.3} parent=0 // pred_fallthru
    _
  // Predicated region
  $region14: #{pg_model_lsm.3} parent=0 // pred_check
    _
  $region15: #{pg_model_lsm.3} parent=0 // pred_check_branch
    %68 = sbr.rel (0) target = $region17
  $region16: #{pg_model_lsm.3} parent=0 // pred_region
    _
  $region17: #{pg_model_lsm.3} parent=0 // pred_fallthru
    _

// kernel: pg_model_lsm.2
$region0: #{pg_model_lsm.2}
  #allocation0 [shape = 'u32[]', space=smem, size = 0x4, offset = 0x4, fixed_abs, tag = 'smem constant byte address 0x4 - core index']
  #allocation1 [shape = 'u32[144,128]{1,0:T(1,128)}', space=vmem, size = 0x12000, scoped, tag = 'internal scratch']
  %s0 = inlined_call_operand.vmem [shape: f32[16,8], index: 0, kind: input, shape index: {}]
  %s1 = inlined_call_operand.vmem [shape: f32[8,32], index: 1, kind: input, shape index: {}]
  %s2 = inlined_call_operand.vmem [shape: f32[1,32], index: 2, kind: input, shape index: {}]
  %s3 = inlined_call_operand.vmem [shape: f32[16,4], index: 3, kind: input, shape index: {}]
  %s4 = inlined_call_operand.vmem [shape: f32[32,2], index: 4, kind: input, shape index: {}]
  %s5 = inlined_call_operand.vmem [shape: f32[4,2], index: 5, kind: input, shape index: {}]
  %s6 = inlined_call_operand.vmem [shape: f32[1,2], index: 6, kind: input, shape index: {}]
  %s7 = inlined_call_operand.vmem [shape: f32[16,2], index: 7, kind: output, shape index: {}]
  %s8 = sld [smem:[#allocation0]]
  $region38: #{pg_model_lsm.2} parent=0
    _
  %s10 = ssub.s32 1, %s8
  %s11 = scalar_select 0, %s10, %s8
  // Predicated region
  $region2: #{pg_model_lsm.2} parent=0 // pred_check
    _
  $region3: #{pg_model_lsm.2} parent=0 // pred_check_branch
    %13 = sbr.rel (0) target = $region5
  $region4: #{pg_model_lsm.2} parent=0 // pred_region
    _
  $region5: #{pg_model_lsm.2} parent=0 // pred_fallthru
    _
  // Predicated region
  $region6: #{pg_model_lsm.2} parent=0 // pred_check
    _
  $region7: #{pg_model_lsm.2} parent=0 // pred_check_branch
    %15 = sbr.rel (0) target = $region9
  $region8: #{pg_model_lsm.2} parent=0 // pred_region
    _
  $region9: #{pg_model_lsm.2} parent=0 // pred_fallthru
    _
  // Predicated region
  $region10: #{pg_model_lsm.2} parent=0 // pred_check
    _
  $region11: #{pg_model_lsm.2} parent=0 // pred_check_branch
    %17 = sbr.rel (0) target = $region13
  $region12: #{pg_model_lsm.2} parent=0 // pred_region
    _
  $region13: #{pg_model_lsm.2} parent=0 // pred_fallthru
    _
  // Predicated region
  $region14: #{pg_model_lsm.2} parent=0 // pred_check
    _
  $region15: #{pg_model_lsm.2} parent=0 // pred_check_branch
    %19 = sbr.rel (0) target = $region17
  $region16: #{pg_model_lsm.2} parent=0 // pred_region
    _
  $region17: #{pg_model_lsm.2} parent=0 // pred_fallthru
    _
  // Predicated region
  $region18: #{pg_model_lsm.2} parent=0 // pred_check
    _
  $region19: #{pg_model_lsm.2} parent=0 // pred_check_branch
    %21 = sbr.rel (0) target = $region21
  $region20: #{pg_model_lsm.2} parent=0 // pred_region
    _
  $region21: #{pg_model_lsm.2} parent=0 // pred_fallthru
    _
  // Predicated region
  $region22: #{pg_model_lsm.2} parent=0 // pred_check
    _
  $region23: #{pg_model_lsm.2} parent=0 // pred_check_branch
    %23 = sbr.rel (0) target = $region25
  $region24: #{pg_model_lsm.2} parent=0 // pred_region
    _
  $region25: #{pg_model_lsm.2} parent=0 // pred_fallthru
    _
  // Predicated region
  $region26: #{pg_model_lsm.2} parent=0 // pred_check
    _
  $region27: #{pg_model_lsm.2} parent=0 // pred_check_branch
    %25 = sbr.rel (0) target = $region29
  $region28: #{pg_model_lsm.2} parent=0 // pred_region
    _
  $region29: #{pg_model_lsm.2} parent=0 // pred_fallthru
    _
  %v26 = vld [vmem:[%s0] sm:$0xff]
  %v27 = vld [vmem:[%s0 + $0x8] sm:$0xff]
  %v28 = vld [vmem:[%s1] sm:$0xff]
  %v29 = vld [vmem:[%s2] sm:$0x1]
  %v31 = vlaneseq
  %v32 = vshrl.u32 %v31, 7
  %v33 = vsub.s32 0, %v32
  %v34 = vrot.slane %v29, %v33
  %vm36 = vcmask 64512
  %v38 = vsel %vm36, %v26, 0
  %v41 = vsel %vm36, %v27, 0
  %43 = vmatprep.subr.mxu0 0.0
  %44 = vmatpush1.msra.mxu0 %v28
  %45 = vmatprep.subr.mxu0 0.0
  %46 = vmatpush1.msra.mxu0 0.0
  %47 = vmatprep.subr.mxu0 0.0
  %48 = vmatpush1.msra.mxu0 0.0
  %49 = vmatprep.subr.mxu0 0.0
  %50 = vmatpush1.msra.mxu0 0.0
  %51 = vmatprep.subr.mxu0 0.0
  %52 = vmatpush1.msra.mxu0 0.0
  %53 = vmatprep.subr.mxu0 0.0
  %54 = vmatpush1.msra.mxu0 0.0
  %55 = vmatprep.subr.mxu0 0.0
  %56 = vmatpush1.msra.mxu0 0.0
  %57 = vmatprep.subr.mxu0 0.0
  %58 = vmatpush1.msra.mxu0 0.0
  %59 = vmatprep.subr.mxu0 0.0
  %60 = vmatpush1.msra.mxu0 0.0
  %61 = vmatprep.subr.mxu0 0.0
  %62 = vmatpush1.msra.mxu0 0.0
  %63 = vmatprep.subr.mxu0 0.0
  %64 = vmatpush1.msra.mxu0 0.0
  %65 = vmatprep.subr.mxu0 0.0
  %66 = vmatpush1.msra.mxu0 0.0
  %67 = vmatprep.subr.mxu0 0.0
  %68 = vmatpush1.msra.mxu0 0.0
  %69 = vmatprep.subr.mxu0 0.0
  %70 = vmatpush1.msra.mxu0 0.0
  %71 = vmatprep.subr.mxu0 0.0
  %72 = vmatpush1.msra.mxu0 0.0
  %73 = vmatprep.subr.mxu0 0.0
  %74 = vmatpush1.msra.mxu0 0.0
  %75 = vmatprep.subr.mxu0 0.0
  %76 = vmatpush1.msra.mxu0 0.0
  %77 = vmatprep.subr.mxu0 0.0
  %78 = vmatpush1.msra.mxu0 0.0
  %79 = vmatprep.subr.mxu0 0.0
  %80 = vmatpush1.msra.mxu0 0.0
  %81 = vmatprep.subr.mxu0 0.0
  %82 = vmatpush1.msra.mxu0 0.0
  %83 = vmatprep.subr.mxu0 0.0
  %84 = vmatpush1.msra.mxu0 0.0
  %85 = vmatprep.subr.mxu0 0.0
  %86 = vmatpush1.msra.mxu0 0.0
  %87 = vmatprep.subr.mxu0 0.0
  %88 = vmatpush1.msra.mxu0 0.0
  %89 = vmatprep.subr.mxu0 0.0
  %90 = vmatpush1.msra.mxu0 0.0
  %91 = vmatprep.subr.mxu0 0.0
  %92 = vmatpush1.msra.mxu0 0.0
  %93 = vmatprep.subr.mxu0 0.0
  %94 = vmatpush1.msra.mxu0 0.0
  %95 = vmatprep.subr.mxu0 0.0
  %96 = vmatpush1.msra.mxu0 0.0
  %97 = vmatprep.subr.mxu0 0.0
  %98 = vmatpush1.msra.mxu0 0.0
  %99 = vmatprep.subr.mxu0 0.0
  %100 = vmatpush1.msra.mxu0 0.0
  %101 = vmatprep.subr.mxu0 0.0
  %102 = vmatpush1.msra.mxu0 0.0
  %103 = vmatprep.subr.mxu0 0.0
  %104 = vmatpush1.msra.mxu0 0.0
  %105 = vmatprep.subr.mxu0 0.0
  %106 = vmatpush1.msra.mxu0 0.0
  %107 = vmatprep.mubr.f32.mxu0 0.0
  %108 = vmatmul.mubr.f32.gmra.mrb[0].mxu0 %v38
  %v109 = vpop.f32.mrb[0].mxu0
  %v110 = vadd.f32 %v34, %v109
  %v111 = vpop.f32.mrb[0].mxu0
  %112 = vmatprep.mubr.f32.mxu0 0.0
  %113 = vmatmul.mubr.f32.gmra.mrb[0].mxu0 %v41
  %v114 = vpop.f32.mrb[0].mxu0
  %v115 = vadd.f32 %v34, %v114
  %v116 = vpop.f32.mrb[0].mxu0
  %117 = vdwg.mxu0
  %v118 = vmax.f32 %v110, 0.0
  %v119 = vmax.f32 %v115, 0.0
  %v120 = vld [vmem:[%s4] sm:$0xff]
  %v121 = vld [vmem:[%s4 + $0x8] sm:$0xff]
  %v122 = vld [vmem:[%s4 + $0x10] sm:$0xff]
  %v123 = vld [vmem:[%s4 + $0x18] sm:$0xff]
  %v124 = vld [vmem:[%s3] sm:$0xff]
  %v125 = vld [vmem:[%s3 + $0x8] sm:$0xff]
  %v126 = vld [vmem:[%s5] sm:$0xf]
  %vm127 = vcmask 31744
  %v129 = vsel %vm127, %v124, 0
  %v132 = vsel %vm127, %v125, 0
  %vm134 = vcmask 1043456
  %v136 = vsel %vm134, %v126, 0
  %138 = vmatprep.subr.mxu0 0.0
  %139 = vmatpush1.msra.mxu0 %v136
  %140 = vmatprep.subr.mxu0 0.0
  %141 = vmatpush1.msra.mxu0 0.0
  %142 = vmatprep.subr.mxu0 0.0
  %143 = vmatpush1.msra.mxu0 0.0
  %144 = vmatprep.subr.mxu0 0.0
  %145 = vmatpush1.msra.mxu0 0.0
  %146 = vmatprep.subr.mxu0 0.0
  %147 = vmatpush1.msra.mxu0 0.0
  %148 = vmatprep.subr.mxu0 0.0
  %149 = vmatpush1.msra.mxu0 0.0
  %150 = vmatprep.subr.mxu0 0.0
  %151 = vmatpush1.msra.mxu0 0.0
  %152 = vmatprep.subr.mxu0 0.0
  %153 = vmatpush1.msra.mxu0 0.0
  %154 = vmatprep.subr.mxu0 0.0
  %155 = vmatpush1.msra.mxu0 0.0
  %156 = vmatprep.subr.mxu0 0.0
  %157 = vmatpush1.msra.mxu0 0.0
  %158 = vmatprep.subr.mxu0 0.0
  %159 = vmatpush1.msra.mxu0 0.0
  %160 = vmatprep.subr.mxu0 0.0
  %161 = vmatpush1.msra.mxu0 0.0
  %162 = vmatprep.subr.mxu0 0.0
  %163 = vmatpush1.msra.mxu0 0.0
  %164 = vmatprep.subr.mxu0 0.0
  %165 = vmatpush1.msra.mxu0 0.0
  %166 = vmatprep.subr.mxu0 0.0
  %167 = vmatpush1.msra.mxu0 0.0
  %168 = vmatprep.subr.mxu0 0.0
  %169 = vmatpush1.msra.mxu0 0.0
  %170 = vmatprep.subr.mxu0 0.0
  %171 = vmatpush1.msra.mxu0 0.0
  %172 = vmatprep.subr.mxu0 0.0
  %173 = vmatpush1.msra.mxu0 0.0
  %174 = vmatprep.subr.mxu0 0.0
  %175 = vmatpush1.msra.mxu0 0.0
  %176 = vmatprep.subr.mxu0 0.0
  %177 = vmatpush1.msra.mxu0 0.0
  %178 = vmatprep.subr.mxu0 0.0
  %179 = vmatpush1.msra.mxu0 0.0
  %180 = vmatprep.subr.mxu0 0.0
  %181 = vmatpush1.msra.mxu0 0.0
  %182 = vmatprep.subr.mxu0 0.0
  %183 = vmatpush1.msra.mxu0 0.0
  %184 = vmatprep.subr.mxu0 0.0
  %185 = vmatpush1.msra.mxu0 0.0
  %186 = vmatprep.subr.mxu0 0.0
  %187 = vmatpush1.msra.mxu0 0.0
  %188 = vmatprep.subr.mxu0 0.0
  %189 = vmatpush1.msra.mxu0 0.0
  %190 = vmatprep.subr.mxu0 0.0
  %191 = vmatpush1.msra.mxu0 0.0
  %192 = vmatprep.subr.mxu0 0.0
  %193 = vmatpush1.msra.mxu0 0.0
  %194 = vmatprep.subr.mxu0 0.0
  %195 = vmatpush1.msra.mxu0 0.0
  %196 = vmatprep.subr.mxu0 0.0
  %197 = vmatpush1.msra.mxu0 0.0
  %198 = vmatprep.subr.mxu0 0.0
  %199 = vmatpush1.msra.mxu0 0.0
  %200 = vmatprep.subr.mxu0 0.0
  %201 = vmatpush1.msra.mxu0 0.0
  %202 = vmatprep.mubr.f32.mxu0 0.0
  %203 = vmatmul.mubr.f32.gmra.mrb[0].mxu0 %v129
  %v204 = vpop.f32.mrb[0].mxu0
  %v205 = vadd.f32 0.0, %v204
  %v206 = vpop.f32.mrb[0].mxu0
  %207 = vmatprep.mubr.f32.mxu0 0.0
  %208 = vmatmul.mubr.f32.gmra.mrb[0].mxu0 %v132
  %v209 = vpop.f32.mrb[0].mxu0
  %v210 = vadd.f32 0.0, %v209
  %v211 = vpop.f32.mrb[0].mxu0
  %212 = vdwg.mxu0
  %vm213 = vcmask 261120
  %v215 = vsel %vm213, %v118, 0
  %v218 = vsel %vm213, %v119, 0
  %220 = vmatprep.subr.mxu0 0.0
  %221 = vmatpush1.msra.mxu0 %v120
  %222 = vmatprep.subr.mxu0 0.0
  %223 = vmatpush1.msra.mxu0 %v121
  %224 = vmatprep.subr.mxu0 0.0
  %225 = vmatpush1.msra.mxu0 %v122
  %226 = vmatprep.subr.mxu0 0.0
  %227 = vmatpush1.msra.mxu0 %v123
  %228 = vmatprep.subr.mxu0 0.0
  %229 = vmatpush1.msra.mxu0 0.0
  %230 = vmatprep.subr.mxu0 0.0
  %231 = vmatpush1.msra.mxu0 0.0
  %232 = vmatprep.subr.mxu0 0.0
  %233 = vmatpush1.msra.mxu0 0.0
  %234 = vmatprep.subr.mxu0 0.0
  %235 = vmatpush1.msra.mxu0 0.0
  %236 = vmatprep.subr.mxu0 0.0
  %237 = vmatpush1.msra.mxu0 0.0
  %238 = vmatprep.subr.mxu0 0.0
  %239 = vmatpush1.msra.mxu0 0.0
  %240 = vmatprep.subr.mxu0 0.0
  %241 = vmatpush1.msra.mxu0 0.0
  %242 = vmatprep.subr.mxu0 0.0
  %243 = vmatpush1.msra.mxu0 0.0
  %244 = vmatprep.subr.mxu0 0.0
  %245 = vmatpush1.msra.mxu0 0.0
  %246 = vmatprep.subr.mxu0 0.0
  %247 = vmatpush1.msra.mxu0 0.0
  %248 = vmatprep.subr.mxu0 0.0
  %249 = vmatpush1.msra.mxu0 0.0
  %250 = vmatprep.subr.mxu0 0.0
  %251 = vmatpush1.msra.mxu0 0.0
  %252 = vmatprep.subr.mxu0 0.0
  %253 = vmatpush1.msra.mxu0 0.0
  %254 = vmatprep.subr.mxu0 0.0
  %255 = vmatpush1.msra.mxu0 0.0
  %256 = vmatprep.subr.mxu0 0.0
  %257 = vmatpush1.msra.mxu0 0.0
  %258 = vmatprep.subr.mxu0 0.0
  %259 = vmatpush1.msra.mxu0 0.0
  %260 = vmatprep.subr.mxu0 0.0
  %261 = vmatpush1.msra.mxu0 0.0
  %262 = vmatprep.subr.mxu0 0.0
  %263 = vmatpush1.msra.mxu0 0.0
  %264 = vmatprep.subr.mxu0 0.0
  %265 = vmatpush1.msra.mxu0 0.0
  %266 = vmatprep.subr.mxu0 0.0
  %267 = vmatpush1.msra.mxu0 0.0
  %268 = vmatprep.subr.mxu0 0.0
  %269 = vmatpush1.msra.mxu0 0.0
  %270 = vmatprep.subr.mxu0 0.0
  %271 = vmatpush1.msra.mxu0 0.0
  %272 = vmatprep.subr.mxu0 0.0
  %273 = vmatpush1.msra.mxu0 0.0
  %274 = vmatprep.subr.mxu0 0.0
  %275 = vmatpush1.msra.mxu0 0.0
  %276 = vmatprep.subr.mxu0 0.0
  %277 = vmatpush1.msra.mxu0 0.0
  %278 = vmatprep.subr.mxu0 0.0
  %279 = vmatpush1.msra.mxu0 0.0
  %280 = vmatprep.subr.mxu0 0.0
  %281 = vmatpush1.msra.mxu0 0.0
  %282 = vmatprep.subr.mxu0 0.0
  %283 = vmatpush1.msra.mxu0 0.0
  %284 = vmatprep.mubr.f32.mxu0 0.0
  %285 = vmatmul.mubr.f32.gmra.mrb[0].mxu0 %v215
  %v286 = vpop.f32.mrb[0].mxu0
  %v287 = vadd.f32 %v205, %v286
  %v288 = vpop.f32.mrb[0].mxu0
  %289 = vmatprep.mubr.f32.mxu0 0.0
  %290 = vmatmul.mubr.f32.gmra.mrb[0].mxu0 %v218
  %v291 = vpop.f32.mrb[0].mxu0
  %v292 = vadd.f32 %v210, %v291
  %v293 = vpop.f32.mrb[0].mxu0
  %294 = vdwg.mxu0
  %v295 = vld [vmem:[%s6] sm:$0x1]
  %v297 = vlaneseq
  %v298 = vshrl.u32 %v297, 7
  %v299 = vsub.s32 0, %v298
  %v300 = vrot.slane %v295, %v299
  %v302 = vadd.f32 %v287, %v300
  %v303 = vadd.f32 %v292, %v300
  %vm304 = vcmask 15360
  %305 = vst.msk [vmem:[%s7] sm:$0xff] %vm304, %v302
  %306 = vst.msk [vmem:[%s7 + $0x8] sm:$0xff] %vm304, %v303
  // Predicated region
  $region30: #{pg_model_lsm.2} parent=0 // pred_check
    _
  $region31: #{pg_model_lsm.2} parent=0 // pred_check_branch
    %308 = sbr.rel (0) target = $region33
  $region32: #{pg_model_lsm.2} parent=0 // pred_region
    _
  $region33: #{pg_model_lsm.2} parent=0 // pred_fallthru
    _
  // Predicated region
  $region34: #{pg_model_lsm.2} parent=0 // pred_check
    _
  $region35: #{pg_model_lsm.2} parent=0 // pred_check_branch
    %310 = sbr.rel (0) target = $region37
  $region36: #{pg_model_lsm.2} parent=0 // pred_region
    _
  $region37: #{pg_model_lsm.2} parent=0 // pred_fallthru
    _

</llo_original>
